<compile_context>
chip_gen: v7x
topology: tpu7x:2x2x1
jax: 0.10.0
libtpu: 0.0.40
codegen_flags: <defaults>
</compile_context>

<pallas_src>
import jax
import jax.numpy as jnp
import numpy as np
from jax.experimental import pallas as pl
from jax.experimental.pallas import tpu as pltpu

BN_EPS = 1e-5
GN_EPS = 1e-5


# ----------------------------------------------------------------------------
# Pallas kernel: per (batch, spatial-tile) fused FSRelation hot path
# ----------------------------------------------------------------------------
def _fsrelation_kernel(scene_ref, x_ref, wcf_ref, bcf_ref, wp_ref, bp_ref, out_ref):
    # Shapes (channels-first):
    #   x_ref    : (1, Cin,  TP)   spatial tile of one batch element (f32)
    #   scene_ref: (1, Cout, 1)    encoded scene embedding for this batch element (f32)
    #   wcf_ref  : (2*Cout, Cin)   fused [content ; feature] conv1x1 weights, BN folded
    #   bcf_ref  : (2*Cout, 1)     fused biases (f32)
    #   wp_ref   : (Cout, Cout+Cin) project conv1x1 weight, BN folded
    #   bp_ref   : (Cout, 1)
    #   out_ref  : (1, Cout, TP)
    cout = wp_ref.shape[0]
    mm_dtype = wcf_ref.dtype                 # f32 or bf16 (MXU operands)

    x = x_ref[0]                             # (Cin, TP) f32
    xm = x.astype(mm_dtype)

    # Fused content encoder + feature re-encoder: single MXU pass, 128-row result.
    cf = jnp.dot(wcf_ref[...], xm, preferred_element_type=jnp.float32) + bcf_ref[...]
    cf = jnp.maximum(cf, 0.0)                # (2*Cout, TP) f32
    content = cf[:cout]                      # (Cout, TP)
    p = cf[cout:]                            # (Cout, TP)

    # relation: sigmoid( sum_c scene_c * content_c )  -> (1, TP)
    rel = jax.nn.sigmoid(jnp.sum(scene_ref[0] * content, axis=0, keepdims=True))

    # project( concat([rel * p, x], channel) ): single K = Cout + Cin contraction.
    refined = jnp.concatenate([(rel * p).astype(mm_dtype), xm], axis=0)   # (Cout+Cin, TP)
    y = jnp.dot(wp_ref[...], refined, preferred_element_type=jnp.float32) + bp_ref[...]
    out_ref[0] = jnp.maximum(y, 0.0)
    # TODO(synk): Dropout2d(p=0.1) has no deterministic forward; eval-mode identity is used.


def _round_up(x, m):
    return ((x + m - 1) // m) * m


def _run_scale(x_ncp, scene_ncl, wcf, bcf, wp, bp, *, tp):
    """x_ncp: (N, Cin, P_pad) f32, scene_ncl: (N, Cout, 1) f32. Returns (N, Cout, P_pad) f32."""
    N, Cin, P = x_ncp.shape
    Cout2 = wcf.shape[0]
    Cout = wp.shape[0]
    grid = (N, P // tp)
    const = lambda shape: pl.BlockSpec(shape, lambda n, t: (0, 0))   # weights: fetched once

    return pl.pallas_call(
        _fsrelation_kernel,
        out_shape=jax.ShapeDtypeStruct((N, Cout, P), jnp.float32),
        grid=grid,
        in_specs=[
            pl.BlockSpec((1, Cout, 1), lambda n, t: (n, 0, 0)),    # scene
            pl.BlockSpec((1, Cin, tp), lambda n, t: (n, 0, t)),    # x tile (channels-first)
            const((Cout2, Cin)),                                   # wcf = [wc ; wf]
            const((Cout2, 1)),                                     # bcf
            const((Cout, Cout2)),                                  # wp
            const((Cout, 1)),                                      # bp
        ],
        out_specs=pl.BlockSpec((1, Cout, tp), lambda n, t: (n, 0, t)),
        compiler_params=pltpu.CompilerParams(
            dimension_semantics=("parallel", "parallel"),
            vmem_limit_bytes=32 * 1024 * 1024),
    )(scene_ncl, x_ncp, wcf, bcf, wp, bp)


# ----------------------------------------------------------------------------
# Parameter construction (deterministic, synthetic) and BN folding
# ----------------------------------------------------------------------------
def _fold_conv_bn(w, b, gamma, beta, mean, var):
    """Conv1x1 (w: (Cout, Cin), b: (Cout,) or None) followed by eval-mode BN.
    Returns (W_eff (Cout, Cin), b_eff (Cout,)) for W_eff @ x + b_eff (channels-first)."""
    scale = gamma / jnp.sqrt(var + BN_EPS)
    w_eff = w * scale[:, None]
    b_conv = b if b is not None else jnp.zeros_like(gamma)
    b_eff = b_conv * scale + (beta - mean * scale)
    return w_eff, b_eff


def make_params(key, scene_channels, in_channels_list, out_channels):
    ks = iter(jax.random.split(key, 64))
    nrm = lambda shape, s=0.1: s * jax.random.normal(next(ks), shape, jnp.float32)
    bn = lambda c: dict(gamma=1.0 + nrm((c,)), beta=nrm((c,)),
                        mean=nrm((c,)), var=0.5 + jnp.abs(nrm((c,))))
    p = {}
    # scene encoder: Conv -> GN(32) -> ReLU -> Conv -> GN(32) -> ReLU
    p["scene"] = dict(
        w1=nrm((out_channels, scene_channels)), b1=nrm((out_channels,)),
        g1=1.0 + nrm((out_channels,)), be1=nrm((out_channels,)),
        w2=nrm((out_channels, out_channels)), b2=nrm((out_channels,)),
        g2=1.0 + nrm((out_channels,)), be2=nrm((out_channels,)))
    p["scales"] = []
    for c in in_channels_list:
        sp = dict(
            content=dict(w=nrm((out_channels, c)), b=nrm((out_channels,)), bn=bn(out_channels)),
            feature=dict(w=nrm((out_channels, c)), b=nrm((out_channels,)), bn=bn(out_channels)),
            project=dict(w=nrm((out_channels, out_channels + c)), bn=bn(out_channels)))
        p["scales"].append(sp)
    return p


def _group_norm(x, gamma, beta, groups=32):
    # x: (N, C) -- GroupNorm over (C//groups) per group (spatial is 1x1)
    N, C = x.shape
    xg = x.reshape(N, groups, C // groups)
    mean = xg.mean(axis=2, keepdims=True)
    var = ((xg - mean) ** 2).mean(axis=2, keepdims=True)
    xn = ((xg - mean) / jnp.sqrt(var + GN_EPS)).reshape(N, C)
    return xn * gamma + beta


def encode_scene(scene_feature, sp):
    # scene_feature: (N, C_s, 1, 1) -> (N, Cout). Tiny compute; stays in JAX glue.
    s = scene_feature[:, :, 0, 0]
    h = jnp.maximum(_group_norm(s @ sp["w1"].T + sp["b1"], sp["g1"], sp["be1"]), 0.0)
    h = jnp.maximum(_group_norm(h @ sp["w2"].T + sp["b2"], sp["g2"], sp["be2"]), 0.0)
    return h


# ----------------------------------------------------------------------------
# Full forward (Pallas path) and pure-JAX reference
# ----------------------------------------------------------------------------
def fsrelation_forward_pallas(scene_feature, features, params, out_channels, use_bf16=False):
    # Non-scale-aware path (scale_aware_proj=False, the module default).
    scene_ncl = encode_scene(scene_feature, params["scene"])[:, :, None]   # (N, Cout, 1)
    mm_dtype = jnp.bfloat16 if use_bf16 else jnp.float32
    outs = []
    for x_nchw, sp in zip(features, params["scales"]):
        N, C, H, W = x_nchw.shape
        P = H * W

        # Fold eval-mode BN into the 1x1 convs; fuse content+feature into one weight.
        wc, bc = _fold_conv_bn(sp["content"]["w"], sp["content"]["b"], **sp["content"]["bn"])
        wf, bf = _fold_conv_bn(sp["feature"]["w"], sp["feature"]["b"], **sp["feature"]["bn"])
        wp, bp = _fold_conv_bn(sp["project"]["w"], None, **sp["project"]["bn"])
        wcf = jnp.concatenate([wc, wf], axis=0)                 # (2*Cout, Cin)
        bcf = jnp.concatenate([bc, bf], axis=0)[:, None]        # (2*Cout, 1)

        # Channels-first flatten (free reshape of the NCHW layout, no transpose pass).
        x_ncp = x_nchw.reshape(N, C, P)

        # Lane-dense spatial tile: multiple of 128 columns, up to 1024.
        tp = min(1024, _round_up(P, 128))
        P_pad = _round_up(P, tp)
        if P_pad != P:
            x_ncp = jnp.pad(x_ncp, ((0, 0), (0, 0), (0, P_pad - P)))

        y = _run_scale(x_ncp, scene_ncl,
                       wcf.astype(mm_dtype), bcf, wp.astype(mm_dtype), bp[:, None], tp=tp)
        outs.append(y[:, :, :P].reshape(N, out_channels, H, W))
    return outs


def fsrelation_forward_ref(scene_feature, features, params, out_channels):
    def conv_bn_relu(x, w, b, bn):
        y = jnp.einsum("nchw,oc->nohw", x, w)
        if b is not None:
            y = y + b[None, :, None, None]
        scale = bn["gamma"] / jnp.sqrt(bn["var"] + BN_EPS)
        y = y * scale[None, :, None, None] + (bn["beta"] - bn["mean"] * scale)[None, :, None, None]
        return jnp.maximum(y, 0.0)

    scene_nc = encode_scene(scene_feature, params["scene"])
    outs = []
    for x, sp in zip(features, params["scales"]):
        cf = conv_bn_relu(x, sp["content"]["w"], sp["content"]["b"], sp["content"]["bn"])
        rel = jax.nn.sigmoid(
            jnp.sum(scene_nc[:, :, None, None] * cf, axis=1, keepdims=True))
        pf = conv_bn_relu(x, sp["feature"]["w"], sp["feature"]["b"], sp["feature"]["bn"])
        refined = jnp.concatenate([rel * pf, x], axis=1)
        outs.append(conv_bn_relu(refined, sp["project"]["w"], None, sp["project"]["bn"]))
    return outs


# ----------------------------------------------------------------------------
if __name__ == "__main__":
    key = jax.random.PRNGKey(0)
    k_params, k_scene, k_f0, k_f1 = jax.random.split(key, 4)

    N = 2
    scene_channels = 64
    out_channels = 64                      # must be divisible by 32 (GroupNorm(32, C))
    in_channels_list = [64, 64]            # FarSeg: FPN features all have out_channels

    scene_feature = jax.random.normal(k_scene, (N, scene_channels, 1, 1), jnp.float32)
    features = [
        jax.random.normal(k_f0, (N, in_channels_list[0], 16, 16), jnp.float32),
        jax.random.normal(k_f1, (N, in_channels_list[1], 8, 8), jnp.float32),
    ]

    params = make_params(k_params, scene_channels, in_channels_list, out_channels)
    refs = fsrelation_forward_ref(scene_feature, features, params, out_channels)

    # f32 matmul path (default, v5e-friendly): strict numerical check.
    outs = fsrelation_forward_pallas(scene_feature, features, params, out_channels,
                                     use_bf16=False)
    outs = [jax.block_until_ready(o) for o in outs]
    for o, r in zip(outs, refs):
        np.testing.assert_allclose(np.asarray(o), np.asarray(r), rtol=2e-4, atol=2e-4)

    # bf16 MXU-operand path (v6e / v7x): f32 accumulation, looser tolerance due to
    # bf16 input rounding of x and the folded weights.
    outs_bf16 = fsrelation_forward_pallas(scene_feature, features, params, out_channels,
                                          use_bf16=True)
    outs_bf16 = [jax.block_until_ready(o) for o in outs_bf16]
    for o, r in zip(outs_bf16, refs):
        np.testing.assert_allclose(np.asarray(o), np.asarray(r), rtol=1e-1, atol=1e-1)

    print("KERNEL_OK")
</pallas_src>

<mosaic_0001>
module attributes {stable_mosaic.version = 11 : i64} {
  func.func @_fsrelation_kernel(%arg0: i32, %arg1: i32, %arg2: memref<1x64x1xf32, #tpu.memory_space<vmem>>, %arg3: memref<1x64x256xf32, #tpu.memory_space<vmem>>, %arg4: memref<128x64xf32, #tpu.memory_space<vmem>>, %arg5: memref<128x1xf32, #tpu.memory_space<vmem>>, %arg6: memref<64x128xf32, #tpu.memory_space<vmem>>, %arg7: memref<64x1xf32, #tpu.memory_space<vmem>>, %arg8: memref<1x64x256xf32, #tpu.memory_space<vmem>>) attributes {dimension_semantics = [#tpu.dimension_semantics<parallel>, #tpu.dimension_semantics<parallel>], iteration_bounds = array<i64: 2, 1>, scalar_prefetch = 0 : i64, scratch_operands = 0 : i64, tpu.core_type = #tpu.core_type<tc>, window_params = [{transform_indices = @transform_0, window_bounds = array<i64: 1, 64, 1>}, {transform_indices = @transform_1, window_bounds = array<i64: 1, 64, 256>}, {pipeline_mode = #tpu.pipeline_mode<synchronous>, transform_indices = @transform_2, window_bounds = array<i64: 128, 64>}, {pipeline_mode = #tpu.pipeline_mode<synchronous>, transform_indices = @transform_3, window_bounds = array<i64: 128, 1>}, {pipeline_mode = #tpu.pipeline_mode<synchronous>, transform_indices = @transform_4, window_bounds = array<i64: 64, 128>}, {pipeline_mode = #tpu.pipeline_mode<synchronous>, transform_indices = @transform_5, window_bounds = array<i64: 64, 1>}, {transform_indices = @transform_6, window_bounds = array<i64: 1, 64, 256>}]} {
    %c0 = arith.constant 0 : index
    %c0_0 = arith.constant 0 : index
    %c0_1 = arith.constant 0 : index
    %0 = vector.load %arg3[%c0, %c0_0, %c0_1] : memref<1x64x256xf32, #tpu.memory_space<vmem>>, vector<1x64x256xf32>
    %1 = vector.shape_cast %0 : vector<1x64x256xf32> to vector<64x256xf32>
    %c0_2 = arith.constant 0 : index
    %c0_3 = arith.constant 0 : index
    %2 = vector.load %arg4[%c0_2, %c0_3] : memref<128x64xf32, #tpu.memory_space<vmem>>, vector<128x64xf32>
    %cst = arith.constant dense<0.000000e+00> : vector<128x256xf32>
    %3 = tpu.matmul %2, %1, %cst {dimension_numbers = #tpu.dot_dimension_numbers<[1], [0], [0], [1], [0, 0, 1, 1], [], []>} : vector<128x64xf32>, vector<64x256xf32>, vector<128x256xf32> -> vector<128x256xf32>
    %c0_4 = arith.constant 0 : index
    %c0_5 = arith.constant 0 : index
    %4 = vector.load %arg5[%c0_4, %c0_5] : memref<128x1xf32, #tpu.memory_space<vmem>>, vector<128x1xf32>
    %5 = vector.broadcast %4 : vector<128x1xf32> to vector<128x256xf32>
    %6 = arith.addf %3, %5 : vector<128x256xf32>
    %cst_6 = arith.constant 0.000000e+00 : f32
    %7 = vector.broadcast %cst_6 : f32 to vector<128x256xf32>
    %8 = arith.maximumf %6, %7 : vector<128x256xf32>
    %9 = vector.extract_strided_slice %8 {offsets = [0, 0], sizes = [64, 256], strides = [1, 1]} : vector<128x256xf32> to vector<64x256xf32>
    %10 = vector.extract_strided_slice %8 {offsets = [64, 0], sizes = [64, 256], strides = [1, 1]} : vector<128x256xf32> to vector<64x256xf32>
    %c0_7 = arith.constant 0 : index
    %c0_8 = arith.constant 0 : index
    %c0_9 = arith.constant 0 : index
    %11 = vector.load %arg2[%c0_7, %c0_8, %c0_9] : memref<1x64x1xf32, #tpu.memory_space<vmem>>, vector<1x64x1xf32>
    %12 = vector.shape_cast %11 : vector<1x64x1xf32> to vector<64x1xf32>
    %13 = vector.broadcast %12 : vector<64x1xf32> to vector<64x256xf32>
    %14 = arith.mulf %13, %9 : vector<64x256xf32>
    %cst_10 = arith.constant dense<0.000000e+00> : vector<256xf32>
    %15 = vector.multi_reduction <add>, %14, %cst_10 [0] : vector<64x256xf32> to vector<256xf32>
    %16 = vector.shape_cast %15 : vector<256xf32> to vector<1x256xf32>
    %17 = arith.negf %16 : vector<1x256xf32>
    %18 = math.exp %17 : vector<1x256xf32>
    %cst_11 = arith.constant 1.000000e+00 : f32
    %19 = vector.broadcast %cst_11 : f32 to vector<1x256xf32>
    %20 = arith.addf %19, %18 : vector<1x256xf32>
    %21 = arith.divf %19, %20 : vector<1x256xf32>
    %22 = vector.broadcast %21 : vector<1x256xf32> to vector<64x256xf32>
    %23 = arith.mulf %22, %10 : vector<64x256xf32>
    %24 = tpu.concatenate %23, %1 in 0 : vector<64x256xf32>, vector<64x256xf32> -> vector<128x256xf32>
    %c0_12 = arith.constant 0 : index
    %c0_13 = arith.constant 0 : index
    %25 = vector.load %arg6[%c0_12, %c0_13] : memref<64x128xf32, #tpu.memory_space<vmem>>, vector<64x128xf32>
    %cst_14 = arith.constant dense<0.000000e+00> : vector<64x256xf32>
    %26 = tpu.matmul %25, %24, %cst_14 {dimension_numbers = #tpu.dot_dimension_numbers<[1], [0], [0], [1], [0, 0, 1, 1], [], []>} : vector<64x128xf32>, vector<128x256xf32>, vector<64x256xf32> -> vector<64x256xf32>
    %c0_15 = arith.constant 0 : index
    %c0_16 = arith.constant 0 : index
    %27 = vector.load %arg7[%c0_15, %c0_16] : memref<64x1xf32, #tpu.memory_space<vmem>>, vector<64x1xf32>
    %28 = vector.broadcast %27 : vector<64x1xf32> to vector<64x256xf32>
    %29 = arith.addf %26, %28 : vector<64x256xf32>
    %cst_17 = arith.constant 0.000000e+00 : f32
    %30 = vector.broadcast %cst_17 : f32 to vector<64x256xf32>
    %31 = arith.maximumf %29, %30 : vector<64x256xf32>
    %c0_18 = arith.constant 0 : index
    %c0_19 = arith.constant 0 : index
    %c0_20 = arith.constant 0 : index
    %32 = vector.load %arg8[%c0_18, %c0_19, %c0_20] : memref<1x64x256xf32, #tpu.memory_space<vmem>>, vector<1x64x256xf32>
    %33 = vector.shape_cast %32 : vector<1x64x256xf32> to vector<64x256xf32>
    %34 = vector.shape_cast %31 : vector<64x256xf32> to vector<1x64x256xf32>
    tpu.vector_store %arg8[%c0_18, %c0_19, %c0_20], %34 {strides = array<i32>} : memref<1x64x256xf32, #tpu.memory_space<vmem>>, vector<1x64x256xf32>,
    return
  }
  func.func @transform_0(%arg0: i32, %arg1: i32) -> (i32, i32, i32) {
    %c0_i32 = arith.constant 0 : i32
    %c0_i32_0 = arith.constant 0 : i32
    %c0_i32_1 = arith.constant 0 : i32
    return %arg0, %c0_i32, %c0_i32_0 : i32, i32, i32
  }
  func.func @transform_1(%arg0: i32, %arg1: i32) -> (i32, i32, i32) {
    %c0_i32 = arith.constant 0 : i32
    %c0_i32_0 = arith.constant 0 : i32
    return %arg0, %c0_i32, %arg1 : i32, i32, i32
  }
  func.func @transform_2(%arg0: i32, %arg1: i32) -> (i32, i32) {
    %c0_i32 = arith.constant 0 : i32
    %c0_i32_0 = arith.constant 0 : i32
    %c0_i32_1 = arith.constant 0 : i32
    return %c0_i32, %c0_i32_0 : i32, i32
  }
  func.func @transform_3(%arg0: i32, %arg1: i32) -> (i32, i32) {
    %c0_i32 = arith.constant 0 : i32
    %c0_i32_0 = arith.constant 0 : i32
    %c0_i32_1 = arith.constant 0 : i32
    return %c0_i32, %c0_i32_0 : i32, i32
  }
  func.func @transform_4(%arg0: i32, %arg1: i32) -> (i32, i32) {
    %c0_i32 = arith.constant 0 : i32
    %c0_i32_0 = arith.constant 0 : i32
    %c0_i32_1 = arith.constant 0 : i32
    return %c0_i32, %c0_i32_0 : i32, i32
  }
  func.func @transform_5(%arg0: i32, %arg1: i32) -> (i32, i32) {
    %c0_i32 = arith.constant 0 : i32
    %c0_i32_0 = arith.constant 0 : i32
    %c0_i32_1 = arith.constant 0 : i32
    return %c0_i32, %c0_i32_0 : i32, i32
  }
  func.func @transform_6(%arg0: i32, %arg1: i32) -> (i32, i32, i32) {
    %c0_i32 = arith.constant 0 : i32
    %c0_i32_0 = arith.constant 0 : i32
    return %arg0, %c0_i32, %arg1 : i32, i32, i32
  }
}

</mosaic_0001>

<llo_original>
// kernel: tpu_custom_call.1
$region0: #{tpu_custom_call.1}
  #allocation0 [shape = 'u32[]', space=smem, size = 0x4, offset = 0x4, fixed_abs, tag = 'smem constant byte address 0x4 - core index']
  #allocation1 [shape = 'u32[144,128]{1,0:T(1,128)}', space=vmem, size = 0x12000, scoped, tag = 'internal scratch']
  %s0 = inlined_call_operand.vmem [shape: f32[2,64,1], index: 0, kind: input, shape index: {}]
  %s1 = inlined_call_operand.vmem [shape: f32[2,64,256], index: 1, kind: input, shape index: {}]
  %s2 = inlined_call_operand.vmem [shape: f32[128,64], index: 2, kind: input, shape index: {}]
  %s3 = inlined_call_operand.vmem [shape: f32[128,1], index: 3, kind: input, shape index: {}]
  %s4 = inlined_call_operand.vmem [shape: f32[64,128], index: 4, kind: input, shape index: {}]
  %s5 = inlined_call_operand.vmem [shape: f32[64,1], index: 5, kind: input, shape index: {}]
  %s6 = inlined_call_operand.hbm [shape: f32[2,64,256], index: 6, kind: output, shape index: {}]
  %s7 = sld [smem:[#allocation0]]
  $region57: #{tpu_custom_call.1} parent=0
    _
  %s9 = ssub.s32 1, %s7
  %s10 = scalar_select 0, %s9, %s7
  $region1: #{tpu_custom_call.1} parent=0
    #allocation2 [shape = 'u8[131072]{0}', space=vmem, size = 0x20000, scoped, tag = 'output window, operand 0']
    #allocation3 [shape = 's32[2]{0}', space=sflag, size = 0x8, scoped, tag = 'scoped memory for tpu_custom_call.1']
    %11 = vsyncpa [#allocation3], 0
    %s12 = scalar_lea.sflag [#allocation3], 1
    %13 = vsyncpa %s12, 0
    loop: start=0, step=1, limit=4
    $region2: #{tpu_custom_call.1} parent=1 // loop_pre_header
      _
    $region3: #{tpu_custom_call.1} parent=1 // loop_header
      %s15 = sphi 0, %s19
      %p16 = scmp.ge.s32.totalorder %s15, 4
      %s22 = sphi 0, %s34
      %s23 = sphi 0, %s30
      %s24 = sphi 0, %s22
      %s25 = sphi 0, %s23
      %s26 = sphi 0, %s24
      %s27 = sphi 0, %s25
      %s37 = sphi 0, %s39
      %s40 = sphi 0, %s37
      %s41 = sphi 0, %s40
      %s57 = sphi 0, %s41
      %s65 = sphi 0, %s67
      %s68 = sphi 0, %s65
      %s69 = sphi 0, %s68
      %s85 = sphi 0, %s69
      %s89 = sphi 0, %s89
      %s91 = sphi 0, %s89
      %s92 = sphi 0, %s91
      %s106 = sphi 0, %s92
      %s110 = sphi 0, %s110
      %s112 = sphi 0, %s110
      %s113 = sphi 0, %s112
      %s127 = sphi 0, %s113
      %s131 = sphi 0, %s131
      %s133 = sphi 0, %s131
      %s134 = sphi 0, %s133
      %s148 = sphi 0, %s134
      %s152 = sphi 0, %s152
      %s154 = sphi 0, %s152
      %s155 = sphi 0, %s154
      %s169 = sphi 0, %s155
      %s177 = sphi 0, %s179
      %s180 = sphi 0, %s177
      %s181 = sphi 0, %s180
      %s197 = sphi 0, %s181
    $region4: #{tpu_custom_call.1} parent=1 // loop_header_branch
      %18 = sbr.rel (%p16) target = $region8
    $region5: #{tpu_custom_call.1} parent=1 // loop_body
      %s20 = ssub.s32 %s15, 1
      %s21 = ssub.s32 %s15, 2
      %s28 = sadd.s32 1, %s23
      %p29 = scmp.ge.s32.totalorder %s28, 1
      %s30 = scalar_select %p29, 0, %s28
      %s31 = sadd.s32 1, %s22
      %s32 = scalar_select %p29, %s31, %s22
      %p33 = scmp.ge.s32.totalorder %s32, 2
      %s34 = scalar_select %p33, 0, %s32
      %s35 = ssub.s32 %s22, %s34
      %p36 = scmp.eq.s32.totalorder %s35, 0
      %s38 = sadd.s32 %s37, 1
      %s39 = scalar_select %p36, %s37, %s38
      %p42 = pneg %p36
      %p43 = scmp.eq.s32.totalorder %s15, 1
      %p44 = por %p42, %p43
      %p45 = scmp.ne.s32.totalorder %s37, %s40
      %p46 = scmp.eq.s32.totalorder %s15, 0
      %p47 = por %p45, %p46
      %p48 = scmp.ne.s32.totalorder %s37, %s40
      %p49 = scmp.eq.s32.totalorder %s20, 1
      %p50 = por %p48, %p49
      %p51 = scmp.ne.s32.totalorder %s40, %s41
      %p52 = scmp.eq.s32.totalorder %s20, 0
      %p53 = por %p51, %p52
      %p54 = scmp.ne.s32.totalorder %s40, %s41
      %p55 = scmp.eq.s32.totalorder %s21, 1
      %p56 = por %p54, %p55
      %p58 = scmp.ne.s32.totalorder %s41, %s57
      %p59 = scmp.eq.s32.totalorder %s21, 0
      %p60 = por %p58, %p59
      %s61 = ssub.s32 %s22, %s34
      %s62 = ssub.s32 %s23, %s30
      %s63 = sor.u32 %s61, %s62
      %p64 = scmp.eq.s32.totalorder %s63, 0
      %s66 = sadd.s32 %s65, 1
      %s67 = scalar_select %p64, %s65, %s66
      %p70 = pneg %p64
      %p71 = scmp.eq.s32.totalorder %s15, 1
      %p72 = por %p70, %p71
      %p73 = scmp.ne.s32.totalorder %s65, %s68
      %p74 = scmp.eq.s32.totalorder %s15, 0
      %p75 = por %p73, %p74
      %p76 = scmp.ne.s32.totalorder %s65, %s68
      %p77 = scmp.eq.s32.totalorder %s20, 1
      %p78 = por %p76, %p77
      %p79 = scmp.ne.s32.totalorder %s68, %s69
      %p80 = scmp.eq.s32.totalorder %s20, 0
      %p81 = por %p79, %p80
      %p82 = scmp.ne.s32.totalorder %s68, %s69
      %p83 = scmp.eq.s32.totalorder %s21, 1
      %p84 = por %p82, %p83
      %p86 = scmp.ne.s32.totalorder %s69, %s85
      %p87 = scmp.eq.s32.totalorder %s21, 0
      %p88 = por %p86, %p87
      %s90 = sadd.s32 %s89, 1
      %p93 = scmp.eq.s32.totalorder %s15, 1
      %p94 = scmp.ne.s32.totalorder %s89, %s91
      %p95 = scmp.eq.s32.totalorder %s15, 0
      %p96 = por %p94, %p95
      %p97 = scmp.ne.s32.totalorder %s89, %s91
      %p98 = scmp.eq.s32.totalorder %s20, 1
      %p99 = por %p97, %p98
      %p100 = scmp.ne.s32.totalorder %s91, %s92
      %p101 = scmp.eq.s32.totalorder %s20, 0
      %p102 = por %p100, %p101
      %p103 = scmp.ne.s32.totalorder %s91, %s92
      %p104 = scmp.eq.s32.totalorder %s21, 1
      %p105 = por %p103, %p104
      %p107 = scmp.ne.s32.totalorder %s92, %s106
      %p108 = scmp.eq.s32.totalorder %s21, 0
      %p109 = por %p107, %p108
      %s111 = sadd.s32 %s110, 1
      %p114 = scmp.eq.s32.totalorder %s15, 1
      %p115 = scmp.ne.s32.totalorder %s110, %s112
      %p116 = scmp.eq.s32.totalorder %s15, 0
      %p117 = por %p115, %p116
      %p118 = scmp.ne.s32.totalorder %s110, %s112
      %p119 = scmp.eq.s32.totalorder %s20, 1
      %p120 = por %p118, %p119
      %p121 = scmp.ne.s32.totalorder %s112, %s113
      %p122 = scmp.eq.s32.totalorder %s20, 0
      %p123 = por %p121, %p122
      %p124 = scmp.ne.s32.totalorder %s112, %s113
      %p125 = scmp.eq.s32.totalorder %s21, 1
      %p126 = por %p124, %p125
      %p128 = scmp.ne.s32.totalorder %s113, %s127
      %p129 = scmp.eq.s32.totalorder %s21, 0
      %p130 = por %p128, %p129
      %s132 = sadd.s32 %s131, 1
      %p135 = scmp.eq.s32.totalorder %s15, 1
      %p136 = scmp.ne.s32.totalorder %s131, %s133
      %p137 = scmp.eq.s32.totalorder %s15, 0
      %p138 = por %p136, %p137
      %p139 = scmp.ne.s32.totalorder %s131, %s133
      %p140 = scmp.eq.s32.totalorder %s20, 1
      %p141 = por %p139, %p140
      %p142 = scmp.ne.s32.totalorder %s133, %s134
      %p143 = scmp.eq.s32.totalorder %s20, 0
      %p144 = por %p142, %p143
      %p145 = scmp.ne.s32.totalorder %s133, %s134
      %p146 = scmp.eq.s32.totalorder %s21, 1
      %p147 = por %p145, %p146
      %p149 = scmp.ne.s32.totalorder %s134, %s148
      %p150 = scmp.eq.s32.totalorder %s21, 0
      %p151 = por %p149, %p150
      %s153 = sadd.s32 %s152, 1
      %p156 = scmp.eq.s32.totalorder %s15, 1
      %p157 = scmp.ne.s32.totalorder %s152, %s154
      %p158 = scmp.eq.s32.totalorder %s15, 0
      %p159 = por %p157, %p158
      %p160 = scmp.ne.s32.totalorder %s152, %s154
      %p161 = scmp.eq.s32.totalorder %s20, 1
      %p162 = por %p160, %p161
      %p163 = scmp.ne.s32.totalorder %s154, %s155
      %p164 = scmp.eq.s32.totalorder %s20, 0
      %p165 = por %p163, %p164
      %p166 = scmp.ne.s32.totalorder %s154, %s155
      %p167 = scmp.eq.s32.totalorder %s21, 1
      %p168 = por %p166, %p167
      %p170 = scmp.ne.s32.totalorder %s155, %s169
      %p171 = scmp.eq.s32.totalorder %s21, 0
      %p172 = por %p170, %p171
      %s173 = ssub.s32 %s22, %s34
      %s174 = ssub.s32 %s23, %s30
      %s175 = sor.u32 %s173, %s174
      %p176 = scmp.eq.s32.totalorder %s175, 0
      %s178 = sadd.s32 %s177, 1
      %s179 = scalar_select %p176, %s177, %s178
      %p182 = pneg %p176
      %p183 = scmp.eq.s32.totalorder %s15, 1
      %p184 = por %p182, %p183
      %p185 = scmp.ne.s32.totalorder %s177, %s180
      %p186 = scmp.eq.s32.totalorder %s15, 0
      %p187 = por %p185, %p186
      %p188 = scmp.ne.s32.totalorder %s177, %s180
      %p189 = scmp.eq.s32.totalorder %s20, 1
      %p190 = por %p188, %p189
      %p191 = scmp.ne.s32.totalorder %s180, %s181
      %p192 = scmp.eq.s32.totalorder %s20, 0
      %p193 = por %p191, %p192
      %p194 = scmp.ne.s32.totalorder %s180, %s181
      %p195 = scmp.eq.s32.totalorder %s21, 1
      %p196 = por %p194, %p195
      %p198 = scmp.ne.s32.totalorder %s181, %s197
      %p199 = scmp.eq.s32.totalorder %s21, 0
      %p200 = por %p198, %p199
      %p201 = scmp.le.s32.totalorder 1, %s15
      %p202 = scmp.lt.s32.totalorder %s15, 3
      %p203 = pnand %p201, %p202
      %p204 = pneg %p203
      // Predicated region
      $region9: #{tpu_custom_call.1} parent=5 // pred_check
        _
      $region10: #{tpu_custom_call.1} parent=5 // pred_check_branch
        %206 = sbr.rel (%p203) target = $region12
      $region11: #{tpu_custom_call.1} parent=5 // pred_region
        %s207 = ssub.s32 %s15, 1
        // Predicated region
        $region13: #{tpu_custom_call.1} parent=11 // pred_check
          %p208 = pneg %p102
        $region14: #{tpu_custom_call.1} parent=11 // pred_check_branch
          %210 = sbr.rel (%p208) target = $region16
        $region15: #{tpu_custom_call.1} parent=11 // pred_region
          _
        $region16: #{tpu_custom_call.1} parent=11 // pred_fallthru
          _
        // Predicated region
        $region17: #{tpu_custom_call.1} parent=11 // pred_check
          %p211 = pneg %p123
        $region18: #{tpu_custom_call.1} parent=11 // pred_check_branch
          %213 = sbr.rel (%p211) target = $region20
        $region19: #{tpu_custom_call.1} parent=11 // pred_region
          _
        $region20: #{tpu_custom_call.1} parent=11 // pred_fallthru
          _
        // Predicated region
        $region21: #{tpu_custom_call.1} parent=11 // pred_check
          %p214 = pneg %p144
        $region22: #{tpu_custom_call.1} parent=11 // pred_check_branch
          %216 = sbr.rel (%p214) target = $region24
        $region23: #{tpu_custom_call.1} parent=11 // pred_region
          _
        $region24: #{tpu_custom_call.1} parent=11 // pred_fallthru
          _
        // Predicated region
        $region25: #{tpu_custom_call.1} parent=11 // pred_check
          %p217 = pneg %p165
        $region26: #{tpu_custom_call.1} parent=11 // pred_check_branch
          %219 = sbr.rel (%p217) target = $region28
        $region27: #{tpu_custom_call.1} parent=11 // pred_region
          _
        $region28: #{tpu_custom_call.1} parent=11 // pred_fallthru
          _
      $region12: #{tpu_custom_call.1} parent=5 // pred_fallthru
        _
      %p220 = scmp.lt.s32.totalorder %s15, 2
      // Predicated region
      $region29: #{tpu_custom_call.1} parent=5 // pred_check
        %p221 = pneg %p220
      $region30: #{tpu_custom_call.1} parent=5 // pred_check_branch
        %223 = sbr.rel (%p221) target = $region32
      $region31: #{tpu_custom_call.1} parent=5 // pred_region
        // Predicated region
        $region33: #{tpu_custom_call.1} parent=31 // pred_check
          %p224 = pneg %p47
        $region34: #{tpu_custom_call.1} parent=31 // pred_check_branch
          %226 = sbr.rel (%p224) target = $region36
        $region35: #{tpu_custom_call.1} parent=31 // pred_region
          %p227 = scmp.lt.s32.totalorder %s22, 1
          %s228 = scalar_select %p227, %s22, 1
          %s229 = smul.addr %s228, 8
          %s230 = smul.addr %s229, 8
          %s231 = scalar_lea.vmem %s0, %s230
        $region36: #{tpu_custom_call.1} parent=31 // pred_fallthru
          _
        // Predicated region
        $region37: #{tpu_custom_call.1} parent=31 // pred_check
          %p232 = pneg %p75
        $region38: #{tpu_custom_call.1} parent=31 // pred_check_branch
          %234 = sbr.rel (%p232) target = $region40
        $region39: #{tpu_custom_call.1} parent=31 // pred_region
          %s235 = smul.u32 2, %s23
          %p236 = scmp.lt.s32.totalorder %s22, 1
          %s237 = scalar_select %p236, %s22, 1
          %p238 = scmp.lt.s32.totalorder %s235, 1
          %s239 = scalar_select %p238, %s235, 1
          %s240 = smul.addr %s237, 16
          %s241 = sadd.s32 %s239, %s240
          %s242 = smul.addr %s241, 8
          %s243 = scalar_lea.vmem %s1, %s242
          %s244 = smul.u32 2, %s23
        $region40: #{tpu_custom_call.1} parent=31 // pred_fallthru
          _
      $region32: #{tpu_custom_call.1} parent=5 // pred_fallthru
        _
      %p245 = scmp.le.s32.totalorder 1, %s15
      %p246 = scmp.lt.s32.totalorder %s15, 3
      %p247 = pnand %p245, %p246
      %p248 = pneg %p247
      // Predicated region
      $region41: #{tpu_custom_call.1} parent=5 // pred_check
        _
      $region42: #{tpu_custom_call.1} parent=5 // pred_check_branch
        %250 = sbr.rel (%p247) target = $region44
      $region43: #{tpu_custom_call.1} parent=5 // pred_region
        %s251 = ssub.s32 %s15, 1
        %p252 = scmp.lt.s32.totalorder %s24, 1
        %s253 = scalar_select %p252, %s24, 1
        %s254 = smul.addr %s253, 8
        %s255 = smul.addr %s254, 8
        %s256 = scalar_lea.vmem %s0, %s255
        %p257 = pneg %p53
        %p258 = pneg %p50
        %s259 = smul.u32 2, %s25
        %p260 = scmp.lt.s32.totalorder %s24, 1
        %s261 = scalar_select %p260, %s24, 1
        %p262 = scmp.lt.s32.totalorder %s259, 1
        %s263 = scalar_select %p262, %s259, 1
        %s264 = smul.addr %s261, 16
        %s265 = sadd.s32 %s263, %s264
        %s266 = smul.addr %s265, 8
        %s267 = scalar_lea.vmem %s1, %s266
        %p268 = pneg %p81
        %p269 = pneg %p78
        %p270 = pneg %p102
        %p271 = pneg %p99
        %p272 = pneg %p123
        %p273 = pneg %p120
        %p274 = pneg %p144
        %p275 = pneg %p141
        %p276 = pneg %p165
        %p277 = pneg %p162
        %p278 = pneg %p193
        %p279 = pneg %p190
        %s280 = sand.u32 %s180, 1
        %s281 = scalar_lea.sflag [#allocation3], %s280
        %s282 = sand.u32 %s180, 1
        %s283 = smul.addr %s282, 128
        %s284 = scalar_lea.vmem [#allocation2], %s283
        %p285 = scmp.lt.s32.totalorder %s24, 1
        %s286 = scalar_select %p285, %s24, 1
        %s287 = smul.addr %s286, 8
        %s288 = smul.addr %s287, 8
        %s289 = scalar_lea.vmem %s0, %s288
        %s290 = smul.u32 2, %s25
        %p291 = scmp.lt.s32.totalorder %s24, 1
        %s292 = scalar_select %p291, %s24, 1
        %p293 = scmp.lt.s32.totalorder %s290, 1
        %s294 = scalar_select %p293, %s290, 1
        %s295 = smul.addr %s292, 16
        %s296 = sadd.s32 %s294, %s295
        %s297 = smul.addr %s296, 8
        %s298 = scalar_lea.vmem %s1, %s297
        %s299 = smul.u32 2, %s25
        %s300 = smul.u32 2, %s25
        %v301 = vld [vmem:[%s298] sm:$0xff]
        %v302 = vld [vmem:[%s298 + $0x8] sm:$0xff]
        %v303 = vld [vmem:[%s298 + $0x10] sm:$0xff]
        %v304 = vld [vmem:[%s298 + $0x18] sm:$0xff]
        %v305 = vld [vmem:[%s298 + $0x20] sm:$0xff]
        %v306 = vld [vmem:[%s298 + $0x28] sm:$0xff]
        %v307 = vld [vmem:[%s298 + $0x30] sm:$0xff]
        %v308 = vld [vmem:[%s298 + $0x38] sm:$0xff]
        %v309 = vld [vmem:[%s298 + $0x40] sm:$0xff]
        %v310 = vld [vmem:[%s298 + $0x48] sm:$0xff]
        %v311 = vld [vmem:[%s298 + $0x50] sm:$0xff]
        %v312 = vld [vmem:[%s298 + $0x58] sm:$0xff]
        %v313 = vld [vmem:[%s298 + $0x60] sm:$0xff]
        %v314 = vld [vmem:[%s298 + $0x68] sm:$0xff]
        %v315 = vld [vmem:[%s298 + $0x70] sm:$0xff]
        %v316 = vld [vmem:[%s298 + $0x78] sm:$0xff]
        %v317 = vld [vmem:[%s2] sm:$0xff]
        %v318 = vld [vmem:[%s2 + $0x8] sm:$0xff]
        %v319 = vld [vmem:[%s2 + $0x10] sm:$0xff]
        %v320 = vld [vmem:[%s2 + $0x18] sm:$0xff]
        %v321 = vld [vmem:[%s2 + $0x20] sm:$0xff]
        %v322 = vld [vmem:[%s2 + $0x28] sm:$0xff]
        %v323 = vld [vmem:[%s2 + $0x30] sm:$0xff]
        %v324 = vld [vmem:[%s2 + $0x38] sm:$0xff]
        %v325 = vld [vmem:[%s2 + $0x40] sm:$0xff]
        %v326 = vld [vmem:[%s2 + $0x48] sm:$0xff]
        %v327 = vld [vmem:[%s2 + $0x50] sm:$0xff]
        %v328 = vld [vmem:[%s2 + $0x58] sm:$0xff]
        %v329 = vld [vmem:[%s2 + $0x60] sm:$0xff]
        %v330 = vld [vmem:[%s2 + $0x68] sm:$0xff]
        %v331 = vld [vmem:[%s2 + $0x70] sm:$0xff]
        %v332 = vld [vmem:[%s2 + $0x78] sm:$0xff]
        %v333 = vld [vmem:[%s3] sm:$0xff]
        %v334 = vld [vmem:[%s3 + $0x8] sm:$0xff]
        %v335 = vld [vmem:[%s3 + $0x10] sm:$0xff]
        %v336 = vld [vmem:[%s3 + $0x18] sm:$0xff]
        %v337 = vld [vmem:[%s3 + $0x20] sm:$0xff]
        %v338 = vld [vmem:[%s3 + $0x28] sm:$0xff]
        %v339 = vld [vmem:[%s3 + $0x30] sm:$0xff]
        %v340 = vld [vmem:[%s3 + $0x38] sm:$0xff]
        %v341 = vld [vmem:[%s3 + $0x40] sm:$0xff]
        %v342 = vld [vmem:[%s3 + $0x48] sm:$0xff]
        %v343 = vld [vmem:[%s3 + $0x50] sm:$0xff]
        %v344 = vld [vmem:[%s3 + $0x58] sm:$0xff]
        %v345 = vld [vmem:[%s3 + $0x60] sm:$0xff]
        %v346 = vld [vmem:[%s3 + $0x68] sm:$0xff]
        %v347 = vld [vmem:[%s3 + $0x70] sm:$0xff]
        %v348 = vld [vmem:[%s3 + $0x78] sm:$0xff]
        %350 = vset.pattern.permute.xlu0 0
        %351 = vperm.xlu0 %350, %v333
        %v352 = vpop.permute.xlu0 %351
        %355 = vset.pattern.permute.xlu0 0
        %356 = vperm.xlu0 %355, %v334
        %v357 = vpop.permute.xlu0 %356
        %360 = vset.pattern.permute.xlu0 0
        %361 = vperm.xlu0 %360, %v335
        %v362 = vpop.permute.xlu0 %361
        %365 = vset.pattern.permute.xlu0 0
        %366 = vperm.xlu0 %365, %v336
        %v367 = vpop.permute.xlu0 %366
        %370 = vset.pattern.permute.xlu0 0
        %371 = vperm.xlu0 %370, %v337
        %v372 = vpop.permute.xlu0 %371
        %375 = vset.pattern.permute.xlu0 0
        %376 = vperm.xlu0 %375, %v338
        %v377 = vpop.permute.xlu0 %376
        %380 = vset.pattern.permute.xlu0 0
        %381 = vperm.xlu0 %380, %v339
        %v382 = vpop.permute.xlu0 %381
        %385 = vset.pattern.permute.xlu0 0
        %386 = vperm.xlu0 %385, %v340
        %v387 = vpop.permute.xlu0 %386
        %390 = vset.pattern.permute.xlu0 0
        %391 = vperm.xlu0 %390, %v341
        %v392 = vpop.permute.xlu0 %391
        %395 = vset.pattern.permute.xlu0 0
        %396 = vperm.xlu0 %395, %v342
        %v397 = vpop.permute.xlu0 %396
        %400 = vset.pattern.permute.xlu0 0
        %401 = vperm.xlu0 %400, %v343
        %v402 = vpop.permute.xlu0 %401
        %405 = vset.pattern.permute.xlu0 0
        %406 = vperm.xlu0 %405, %v344
        %v407 = vpop.permute.xlu0 %406
        %410 = vset.pattern.permute.xlu0 0
        %411 = vperm.xlu0 %410, %v345
        %v412 = vpop.permute.xlu0 %411
        %415 = vset.pattern.permute.xlu0 0
        %416 = vperm.xlu0 %415, %v346
        %v417 = vpop.permute.xlu0 %416
        %420 = vset.pattern.permute.xlu0 0
        %421 = vperm.xlu0 %420, %v347
        %v422 = vpop.permute.xlu0 %421
        %425 = vset.pattern.permute.xlu0 0
        %426 = vperm.xlu0 %425, %v348
        %v427 = vpop.permute.xlu0 %426
        %vm429 = vcmask 523264
        %v431 = vsel %vm429, %v317, 0
        %v434 = vsel %vm429, %v318, 0
        %v437 = vsel %vm429, %v319, 0
        %v440 = vsel %vm429, %v320, 0
        %v443 = vsel %vm429, %v321, 0
        %v446 = vsel %vm429, %v322, 0
        %v449 = vsel %vm429, %v323, 0
        %v452 = vsel %vm429, %v324, 0
        %v455 = vsel %vm429, %v325, 0
        %v458 = vsel %vm429, %v326, 0
        %v461 = vsel %vm429, %v327, 0
        %v464 = vsel %vm429, %v328, 0
        %v467 = vsel %vm429, %v329, 0
        %v470 = vsel %vm429, %v330, 0
        %v473 = vsel %vm429, %v331, 0
        %v476 = vsel %vm429, %v332, 0
        %478 = vmatprep.subr.mxu0 %v302
        %479 = vmatpush1.msra.mxu0 %v301
        %480 = vmatprep.subr.mxu0 %v304
        %481 = vmatpush1.msra.mxu0 %v303
        %482 = vmatprep.subr.mxu0 %v306
        %483 = vmatpush1.msra.mxu0 %v305
        %484 = vmatprep.subr.mxu0 %v308
        %485 = vmatpush1.msra.mxu0 %v307
        %486 = vmatprep.subr.mxu0 %v310
        %487 = vmatpush1.msra.mxu0 %v309
        %488 = vmatprep.subr.mxu0 %v312
        %489 = vmatpush1.msra.mxu0 %v311
        %490 = vmatprep.subr.mxu0 %v314
        %491 = vmatpush1.msra.mxu0 %v313
        %492 = vmatprep.subr.mxu0 %v316
        %493 = vmatpush1.msra.mxu0 %v315
        %494 = vmatprep.subr.mxu0 0.0
        %495 = vmatpush1.msra.mxu0 0.0
        %496 = vmatprep.subr.mxu0 0.0
        %497 = vmatpush1.msra.mxu0 0.0
        %498 = vmatprep.subr.mxu0 0.0
        %499 = vmatpush1.msra.mxu0 0.0
        %500 = vmatprep.subr.mxu0 0.0
        %501 = vmatpush1.msra.mxu0 0.0
        %502 = vmatprep.subr.mxu0 0.0
        %503 = vmatpush1.msra.mxu0 0.0
        %504 = vmatprep.subr.mxu0 0.0
        %505 = vmatpush1.msra.mxu0 0.0
        %506 = vmatprep.subr.mxu0 0.0
        %507 = vmatpush1.msra.mxu0 0.0
        %508 = vmatprep.subr.mxu0 0.0
        %509 = vmatpush1.msra.mxu0 0.0
        %510 = vmatprep.subr.mxu0 0.0
        %511 = vmatpush1.msra.mxu0 0.0
        %512 = vmatprep.subr.mxu0 0.0
        %513 = vmatpush1.msra.mxu0 0.0
        %514 = vmatprep.subr.mxu0 0.0
        %515 = vmatpush1.msra.mxu0 0.0
        %516 = vmatprep.subr.mxu0 0.0
        %517 = vmatpush1.msra.mxu0 0.0
        %518 = vmatprep.subr.mxu0 0.0
        %519 = vmatpush1.msra.mxu0 0.0
        %520 = vmatprep.subr.mxu0 0.0
        %521 = vmatpush1.msra.mxu0 0.0
        %522 = vmatprep.subr.mxu0 0.0
        %523 = vmatpush1.msra.mxu0 0.0
        %524 = vmatprep.subr.mxu0 0.0
        %525 = vmatpush1.msra.mxu0 0.0
        %526 = vmatprep.subr.mxu0 0.0
        %527 = vmatpush1.msra.mxu0 0.0
        %528 = vmatprep.subr.mxu0 0.0
        %529 = vmatpush1.msra.mxu0 0.0
        %530 = vmatprep.subr.mxu0 0.0
        %531 = vmatpush1.msra.mxu0 0.0
        %532 = vmatprep.subr.mxu0 0.0
        %533 = vmatpush1.msra.mxu0 0.0
        %534 = vmatprep.subr.mxu0 0.0
        %535 = vmatpush1.msra.mxu0 0.0
        %536 = vmatprep.subr.mxu0 0.0
        %537 = vmatpush1.msra.mxu0 0.0
        %538 = vmatprep.subr.mxu0 0.0
        %539 = vmatpush1.msra.mxu0 0.0
        %540 = vmatprep.subr.mxu0 0.0
        %541 = vmatpush1.msra.mxu0 0.0
        %542 = vmatprep.mubr.f32.mxu0 0.0
        %543 = vmatmul.mubr.f32.gmra.mrb[0].mxu0 %v431
        %v544 = vpop.f32.mrb[0].mxu0
        %v545 = vadd.f32 %v352, %v544
        %v546 = vpop.f32.mrb[0].mxu0
        %v547 = vadd.f32 %v352, %v546
        %548 = vmatprep.mubr.f32.mxu0 0.0
        %549 = vmatmul.mubr.f32.gmra.mrb[0].mxu0 %v434
        %v550 = vpop.f32.mrb[0].mxu0
        %v551 = vadd.f32 %v357, %v550
        %v552 = vpop.f32.mrb[0].mxu0
        %v553 = vadd.f32 %v357, %v552
        %554 = vmatprep.mubr.f32.mxu0 0.0
        %555 = vmatmul.mubr.f32.gmra.mrb[0].mxu0 %v437
        %v556 = vpop.f32.mrb[0].mxu0
        %v557 = vadd.f32 %v362, %v556
        %v558 = vpop.f32.mrb[0].mxu0
        %v559 = vadd.f32 %v362, %v558
        %560 = vmatprep.mubr.f32.mxu0 0.0
        %561 = vmatmul.mubr.f32.gmra.mrb[0].mxu0 %v440
        %v562 = vpop.f32.mrb[0].mxu0
        %v563 = vadd.f32 %v367, %v562
        %v564 = vpop.f32.mrb[0].mxu0
        %v565 = vadd.f32 %v367, %v564
        %566 = vmatprep.mubr.f32.mxu0 0.0
        %567 = vmatmul.mubr.f32.gmra.mrb[0].mxu0 %v443
        %v568 = vpop.f32.mrb[0].mxu0
        %v569 = vadd.f32 %v372, %v568
        %v570 = vpop.f32.mrb[0].mxu0
        %v571 = vadd.f32 %v372, %v570
        %572 = vmatprep.mubr.f32.mxu0 0.0
        %573 = vmatmul.mubr.f32.gmra.mrb[0].mxu0 %v446
        %v574 = vpop.f32.mrb[0].mxu0
        %v575 = vadd.f32 %v377, %v574
        %v576 = vpop.f32.mrb[0].mxu0
        %v577 = vadd.f32 %v377, %v576
        %578 = vmatprep.mubr.f32.mxu0 0.0
        %579 = vmatmul.mubr.f32.gmra.mrb[0].mxu0 %v449
        %v580 = vpop.f32.mrb[0].mxu0
        %v581 = vadd.f32 %v382, %v580
        %v582 = vpop.f32.mrb[0].mxu0
        %v583 = vadd.f32 %v382, %v582
        %584 = vmatprep.mubr.f32.mxu0 0.0
        %585 = vmatmul.mubr.f32.gmra.mrb[0].mxu0 %v452
        %v586 = vpop.f32.mrb[0].mxu0
        %v587 = vadd.f32 %v387, %v586
        %v588 = vpop.f32.mrb[0].mxu0
        %v589 = vadd.f32 %v387, %v588
        %590 = vmatprep.mubr.f32.mxu0 0.0
        %591 = vmatmul.mubr.f32.gmra.mrb[0].mxu0 %v455
        %v592 = vpop.f32.mrb[0].mxu0
        %v593 = vadd.f32 %v392, %v592
        %v594 = vpop.f32.mrb[0].mxu0
        %v595 = vadd.f32 %v392, %v594
        %596 = vmatprep.mubr.f32.mxu0 0.0
        %597 = vmatmul.mubr.f32.gmra.mrb[0].mxu0 %v458
        %v598 = vpop.f32.mrb[0].mxu0
        %v599 = vadd.f32 %v397, %v598
        %v600 = vpop.f32.mrb[0].mxu0
        %v601 = vadd.f32 %v397, %v600
        %602 = vmatprep.mubr.f32.mxu0 0.0
        %603 = vmatmul.mubr.f32.gmra.mrb[0].mxu0 %v461
        %v604 = vpop.f32.mrb[0].mxu0
        %v605 = vadd.f32 %v402, %v604
        %v606 = vpop.f32.mrb[0].mxu0
        %v607 = vadd.f32 %v402, %v606
        %608 = vmatprep.mubr.f32.mxu0 0.0
        %609 = vmatmul.mubr.f32.gmra.mrb[0].mxu0 %v464
        %v610 = vpop.f32.mrb[0].mxu0
        %v611 = vadd.f32 %v407, %v610
        %v612 = vpop.f32.mrb[0].mxu0
        %v613 = vadd.f32 %v407, %v612
        %614 = vmatprep.mubr.f32.mxu0 0.0
        %615 = vmatmul.mubr.f32.gmra.mrb[0].mxu0 %v467
        %v616 = vpop.f32.mrb[0].mxu0
        %v617 = vadd.f32 %v412, %v616
        %v618 = vpop.f32.mrb[0].mxu0
        %v619 = vadd.f32 %v412, %v618
        %620 = vmatprep.mubr.f32.mxu0 0.0
        %621 = vmatmul.mubr.f32.gmra.mrb[0].mxu0 %v470
        %v622 = vpop.f32.mrb[0].mxu0
        %v623 = vadd.f32 %v417, %v622
        %v624 = vpop.f32.mrb[0].mxu0
        %v625 = vadd.f32 %v417, %v624
        %626 = vmatprep.mubr.f32.mxu0 0.0
        %627 = vmatmul.mubr.f32.gmra.mrb[0].mxu0 %v473
        %v628 = vpop.f32.mrb[0].mxu0
        %v629 = vadd.f32 %v422, %v628
        %v630 = vpop.f32.mrb[0].mxu0
        %v631 = vadd.f32 %v422, %v630
        %632 = vmatprep.mubr.f32.mxu0 0.0
        %633 = vmatmul.mubr.f32.gmra.mrb[0].mxu0 %v476
        %v634 = vpop.f32.mrb[0].mxu0
        %v635 = vadd.f32 %v427, %v634
        %v636 = vpop.f32.mrb[0].mxu0
        %v637 = vadd.f32 %v427, %v636
        %638 = vdwg.mxu0
        %v639 = vmax.f32 %v545, 0.0
        %v640 = vmax.f32 %v547, 0.0
        %v641 = vmax.f32 %v551, 0.0
        %v642 = vmax.f32 %v553, 0.0
        %v643 = vmax.f32 %v557, 0.0
        %v644 = vmax.f32 %v559, 0.0
        %v645 = vmax.f32 %v563, 0.0
        %v646 = vmax.f32 %v565, 0.0
        %v647 = vmax.f32 %v569, 0.0
        %v648 = vmax.f32 %v571, 0.0
        %v649 = vmax.f32 %v575, 0.0
        %v650 = vmax.f32 %v577, 0.0
        %v651 = vmax.f32 %v581, 0.0
        %v652 = vmax.f32 %v583, 0.0
        %v653 = vmax.f32 %v587, 0.0
        %v654 = vmax.f32 %v589, 0.0
        %v655 = vmax.f32 %v593, 0.0
        %v656 = vmax.f32 %v595, 0.0
        %v657 = vmax.f32 %v599, 0.0
        %v658 = vmax.f32 %v601, 0.0
        %v659 = vmax.f32 %v605, 0.0
        %v660 = vmax.f32 %v607, 0.0
        %v661 = vmax.f32 %v611, 0.0
        %v662 = vmax.f32 %v613, 0.0
        %v663 = vmax.f32 %v617, 0.0
        %v664 = vmax.f32 %v619, 0.0
        %v665 = vmax.f32 %v623, 0.0
        %v666 = vmax.f32 %v625, 0.0
        %v667 = vmax.f32 %v629, 0.0
        %v668 = vmax.f32 %v631, 0.0
        %v669 = vmax.f32 %v635, 0.0
        %v670 = vmax.f32 %v637, 0.0
        %v671 = vld [vmem:[%s289] sm:$0xff]
        %v672 = vld [vmem:[%s289 + $0x8] sm:$0xff]
        %v673 = vld [vmem:[%s289 + $0x10] sm:$0xff]
        %v674 = vld [vmem:[%s289 + $0x18] sm:$0xff]
        %v675 = vld [vmem:[%s289 + $0x20] sm:$0xff]
        %v676 = vld [vmem:[%s289 + $0x28] sm:$0xff]
        %v677 = vld [vmem:[%s289 + $0x30] sm:$0xff]
        %v678 = vld [vmem:[%s289 + $0x38] sm:$0xff]
        %680 = vset.pattern.permute.xlu0 0
        %681 = vperm.xlu0 %680, %v671
        %v682 = vpop.permute.xlu0 %681
        %685 = vset.pattern.permute.xlu0 0
        %686 = vperm.xlu0 %685, %v672
        %v687 = vpop.permute.xlu0 %686
        %690 = vset.pattern.permute.xlu0 0
        %691 = vperm.xlu0 %690, %v673
        %v692 = vpop.permute.xlu0 %691
        %695 = vset.pattern.permute.xlu0 0
        %696 = vperm.xlu0 %695, %v674
        %v697 = vpop.permute.xlu0 %696
        %700 = vset.pattern.permute.xlu0 0
        %701 = vperm.xlu0 %700, %v675
        %v702 = vpop.permute.xlu0 %701
        %705 = vset.pattern.permute.xlu0 0
        %706 = vperm.xlu0 %705, %v676
        %v707 = vpop.permute.xlu0 %706
        %710 = vset.pattern.permute.xlu0 0
        %711 = vperm.xlu0 %710, %v677
        %v712 = vpop.permute.xlu0 %711
        %715 = vset.pattern.permute.xlu0 0
        %716 = vperm.xlu0 %715, %v678
        %v717 = vpop.permute.xlu0 %716
        %v719 = vmul.f32 %v682, %v639
        %v720 = vmul.f32 %v682, %v640
        %v721 = vmul.f32 %v687, %v641
        %v722 = vmul.f32 %v687, %v642
        %v723 = vmul.f32 %v692, %v643
        %v724 = vmul.f32 %v692, %v644
        %v725 = vmul.f32 %v697, %v645
        %v726 = vmul.f32 %v697, %v646
        %v727 = vmul.f32 %v702, %v647
        %v728 = vmul.f32 %v702, %v648
        %v729 = vmul.f32 %v707, %v649
        %v730 = vmul.f32 %v707, %v650
        %v731 = vmul.f32 %v712, %v651
        %v732 = vmul.f32 %v712, %v652
        %v733 = vmul.f32 %v717, %v653
        %v734 = vmul.f32 %v717, %v654
        %v735 = vadd.f32 %v719, %v721
        %v736 = vadd.f32 %v735, %v723
        %v737 = vadd.f32 %v736, %v725
        %v738 = vadd.f32 %v737, %v727
        %v739 = vadd.f32 %v738, %v729
        %v740 = vadd.f32 %v739, %v731
        %v741 = vadd.f32 %v740, %v733
        %v742 = vrot.slane %v741, 4
        %v743 = vadd.f32 %v741, %v742
        %v744 = vrot.slane %v743, 2
        %v745 = vadd.f32 %v743, %v744
        %v746 = vrot.slane %v745, 1
        %v747 = vadd.f32 %v745, %v746
        %v748 = vadd.f32 %v720, %v722
        %v749 = vadd.f32 %v748, %v724
        %v750 = vadd.f32 %v749, %v726
        %v751 = vadd.f32 %v750, %v728
        %v752 = vadd.f32 %v751, %v730
        %v753 = vadd.f32 %v752, %v732
        %v754 = vadd.f32 %v753, %v734
        %v755 = vrot.slane %v754, 4
        %v756 = vadd.f32 %v754, %v755
        %v757 = vrot.slane %v756, 2
        %v758 = vadd.f32 %v756, %v757
        %v759 = vrot.slane %v758, 1
        %v760 = vadd.f32 %v758, %v759
        %v761 = vxor.u32 %v747, 2147483648
        %v762 = vxor.u32 %v760, 2147483648
        %v763 = vmul.f32 %v761, 1.442695
        %v764 = vpow.pop %v763
        %v765 = vmul.f32 %v762, 1.442695
        %v766 = vpow.pop %v765
        %v767 = vadd.f32 %v764, 1.0
        %v768 = vadd.f32 %v766, 1.0
        %v769 = vrcp.pop %v767
        %v770 = vmul.f32 1.0, %v769
        %v771 = vrcp.pop %v768
        %v772 = vmul.f32 1.0, %v771
        %v773 = vmul.f32 %v770, %v655
        %v774 = vmul.f32 %v772, %v656
        %v775 = vmul.f32 %v770, %v657
        %v776 = vmul.f32 %v772, %v658
        %v777 = vmul.f32 %v770, %v659
        %v778 = vmul.f32 %v772, %v660
        %v779 = vmul.f32 %v770, %v661
        %v780 = vmul.f32 %v772, %v662
        %v781 = vmul.f32 %v770, %v663
        %v782 = vmul.f32 %v772, %v664
        %v783 = vmul.f32 %v770, %v665
        %v784 = vmul.f32 %v772, %v666
        %v785 = vmul.f32 %v770, %v667
        %v786 = vmul.f32 %v772, %v668
        %v787 = vmul.f32 %v770, %v669
        %v788 = vmul.f32 %v772, %v670
        %v789 = vld [vmem:[%s4] sm:$0xff]
        %v790 = vld [vmem:[%s4 + $0x8] sm:$0xff]
        %v791 = vld [vmem:[%s4 + $0x10] sm:$0xff]
        %v792 = vld [vmem:[%s4 + $0x18] sm:$0xff]
        %v793 = vld [vmem:[%s4 + $0x20] sm:$0xff]
        %v794 = vld [vmem:[%s4 + $0x28] sm:$0xff]
        %v795 = vld [vmem:[%s4 + $0x30] sm:$0xff]
        %v796 = vld [vmem:[%s4 + $0x38] sm:$0xff]
        %v797 = vld [vmem:[%s5] sm:$0xff]
        %v798 = vld [vmem:[%s5 + $0x8] sm:$0xff]
        %v799 = vld [vmem:[%s5 + $0x10] sm:$0xff]
        %v800 = vld [vmem:[%s5 + $0x18] sm:$0xff]
        %v801 = vld [vmem:[%s5 + $0x20] sm:$0xff]
        %v802 = vld [vmem:[%s5 + $0x28] sm:$0xff]
        %v803 = vld [vmem:[%s5 + $0x30] sm:$0xff]
        %v804 = vld [vmem:[%s5 + $0x38] sm:$0xff]
        %806 = vset.pattern.permute.xlu0 0
        %807 = vperm.xlu0 %806, %v797
        %v808 = vpop.permute.xlu0 %807
        %811 = vset.pattern.permute.xlu0 0
        %812 = vperm.xlu0 %811, %v798
        %v813 = vpop.permute.xlu0 %812
        %816 = vset.pattern.permute.xlu0 0
        %817 = vperm.xlu0 %816, %v799
        %v818 = vpop.permute.xlu0 %817
        %821 = vset.pattern.permute.xlu0 0
        %822 = vperm.xlu0 %821, %v800
        %v823 = vpop.permute.xlu0 %822
        %826 = vset.pattern.permute.xlu0 0
        %827 = vperm.xlu0 %826, %v801
        %v828 = vpop.permute.xlu0 %827
        %831 = vset.pattern.permute.xlu0 0
        %832 = vperm.xlu0 %831, %v802
        %v833 = vpop.permute.xlu0 %832
        %836 = vset.pattern.permute.xlu0 0
        %837 = vperm.xlu0 %836, %v803
        %v838 = vpop.permute.xlu0 %837
        %841 = vset.pattern.permute.xlu0 0
        %842 = vperm.xlu0 %841, %v804
        %v843 = vpop.permute.xlu0 %842
        %845 = vmatprep.subr.mxu0 %v774
        %846 = vmatpush1.msra.mxu0 %v773
        %847 = vmatprep.subr.mxu0 %v776
        %848 = vmatpush1.msra.mxu0 %v775
        %849 = vmatprep.subr.mxu0 %v778
        %850 = vmatpush1.msra.mxu0 %v777
        %851 = vmatprep.subr.mxu0 %v780
        %852 = vmatpush1.msra.mxu0 %v779
        %853 = vmatprep.subr.mxu0 %v782
        %854 = vmatpush1.msra.mxu0 %v781
        %855 = vmatprep.subr.mxu0 %v784
        %856 = vmatpush1.msra.mxu0 %v783
        %857 = vmatprep.subr.mxu0 %v786
        %858 = vmatpush1.msra.mxu0 %v785
        %859 = vmatprep.subr.mxu0 %v788
        %860 = vmatpush1.msra.mxu0 %v787
        %861 = vmatprep.subr.mxu0 %v302
        %862 = vmatpush1.msra.mxu0 %v301
        %863 = vmatprep.subr.mxu0 %v304
        %864 = vmatpush1.msra.mxu0 %v303
        %865 = vmatprep.subr.mxu0 %v306
        %866 = vmatpush1.msra.mxu0 %v305
        %867 = vmatprep.subr.mxu0 %v308
        %868 = vmatpush1.msra.mxu0 %v307
        %869 = vmatprep.subr.mxu0 %v310
        %870 = vmatpush1.msra.mxu0 %v309
        %871 = vmatprep.subr.mxu0 %v312
        %872 = vmatpush1.msra.mxu0 %v311
        %873 = vmatprep.subr.mxu0 %v314
        %874 = vmatpush1.msra.mxu0 %v313
        %875 = vmatprep.subr.mxu0 %v316
        %876 = vmatpush1.msra.mxu0 %v315
        %877 = vmatprep.subr.mxu0 0.0
        %878 = vmatpush1.msra.mxu0 0.0
        %879 = vmatprep.subr.mxu0 0.0
        %880 = vmatpush1.msra.mxu0 0.0
        %881 = vmatprep.subr.mxu0 0.0
        %882 = vmatpush1.msra.mxu0 0.0
        %883 = vmatprep.subr.mxu0 0.0
        %884 = vmatpush1.msra.mxu0 0.0
        %885 = vmatprep.subr.mxu0 0.0
        %886 = vmatpush1.msra.mxu0 0.0
        %887 = vmatprep.subr.mxu0 0.0
        %888 = vmatpush1.msra.mxu0 0.0
        %889 = vmatprep.subr.mxu0 0.0
        %890 = vmatpush1.msra.mxu0 0.0
        %891 = vmatprep.subr.mxu0 0.0
        %892 = vmatpush1.msra.mxu0 0.0
        %893 = vmatprep.subr.mxu0 0.0
        %894 = vmatpush1.msra.mxu0 0.0
        %895 = vmatprep.subr.mxu0 0.0
        %896 = vmatpush1.msra.mxu0 0.0
        %897 = vmatprep.subr.mxu0 0.0
        %898 = vmatpush1.msra.mxu0 0.0
        %899 = vmatprep.subr.mxu0 0.0
        %900 = vmatpush1.msra.mxu0 0.0
        %901 = vmatprep.subr.mxu0 0.0
        %902 = vmatpush1.msra.mxu0 0.0
        %903 = vmatprep.subr.mxu0 0.0
        %904 = vmatpush1.msra.mxu0 0.0
        %905 = vmatprep.subr.mxu0 0.0
        %906 = vmatpush1.msra.mxu0 0.0
        %907 = vmatprep.subr.mxu0 0.0
        %908 = vmatpush1.msra.mxu0 0.0
        %909 = vmatprep.mubr.f32.mxu0 0.0
        %910 = vmatmul.mubr.f32.gmra.mrb[0].mxu0 %v789
        %v911 = vpop.f32.mrb[0].mxu0
        %v912 = vadd.f32 %v808, %v911
        %v913 = vpop.f32.mrb[0].mxu0
        %v914 = vadd.f32 %v808, %v913
        %915 = vmatprep.mubr.f32.mxu0 0.0
        %916 = vmatmul.mubr.f32.gmra.mrb[0].mxu0 %v790
        %v917 = vpop.f32.mrb[0].mxu0
        %v918 = vadd.f32 %v813, %v917
        %v919 = vpop.f32.mrb[0].mxu0
        %v920 = vadd.f32 %v813, %v919
        %921 = vmatprep.mubr.f32.mxu0 0.0
        %922 = vmatmul.mubr.f32.gmra.mrb[0].mxu0 %v791
        %v923 = vpop.f32.mrb[0].mxu0
        %v924 = vadd.f32 %v818, %v923
        %v925 = vpop.f32.mrb[0].mxu0
        %v926 = vadd.f32 %v818, %v925
        %927 = vmatprep.mubr.f32.mxu0 0.0
        %928 = vmatmul.mubr.f32.gmra.mrb[0].mxu0 %v792
        %v929 = vpop.f32.mrb[0].mxu0
        %v930 = vadd.f32 %v823, %v929
        %v931 = vpop.f32.mrb[0].mxu0
        %v932 = vadd.f32 %v823, %v931
        %933 = vmatprep.mubr.f32.mxu0 0.0
        %934 = vmatmul.mubr.f32.gmra.mrb[0].mxu0 %v793
        %v935 = vpop.f32.mrb[0].mxu0
        %v936 = vadd.f32 %v828, %v935
        %v937 = vpop.f32.mrb[0].mxu0
        %v938 = vadd.f32 %v828, %v937
        %939 = vmatprep.mubr.f32.mxu0 0.0
        %940 = vmatmul.mubr.f32.gmra.mrb[0].mxu0 %v794
        %v941 = vpop.f32.mrb[0].mxu0
        %v942 = vadd.f32 %v833, %v941
        %v943 = vpop.f32.mrb[0].mxu0
        %v944 = vadd.f32 %v833, %v943
        %945 = vmatprep.mubr.f32.mxu0 0.0
        %946 = vmatmul.mubr.f32.gmra.mrb[0].mxu0 %v795
        %v947 = vpop.f32.mrb[0].mxu0
        %v948 = vadd.f32 %v838, %v947
        %v949 = vpop.f32.mrb[0].mxu0
        %v950 = vadd.f32 %v838, %v949
        %951 = vmatprep.mubr.f32.mxu0 0.0
        %952 = vmatmul.mubr.f32.gmra.mrb[0].mxu0 %v796
        %v953 = vpop.f32.mrb[0].mxu0
        %v954 = vadd.f32 %v843, %v953
        %v955 = vpop.f32.mrb[0].mxu0
        %v956 = vadd.f32 %v843, %v955
        %957 = vdwg.mxu0
        %v958 = vmax.f32 %v912, 0.0
        %v959 = vmax.f32 %v914, 0.0
        %v960 = vmax.f32 %v918, 0.0
        %v961 = vmax.f32 %v920, 0.0
        %v962 = vmax.f32 %v924, 0.0
        %v963 = vmax.f32 %v926, 0.0
        %v964 = vmax.f32 %v930, 0.0
        %v965 = vmax.f32 %v932, 0.0
        %v966 = vmax.f32 %v936, 0.0
        %v967 = vmax.f32 %v938, 0.0
        %v968 = vmax.f32 %v942, 0.0
        %v969 = vmax.f32 %v944, 0.0
        %v970 = vmax.f32 %v948, 0.0
        %v971 = vmax.f32 %v950, 0.0
        %v972 = vmax.f32 %v954, 0.0
        %v973 = vmax.f32 %v956, 0.0
        %974 = vst [vmem:[%s284] sm:$0xff] %v958
        %975 = vst [vmem:[%s284 + $0x8] sm:$0xff] %v959
        %976 = vst [vmem:[%s284 + $0x10] sm:$0xff] %v960
        %977 = vst [vmem:[%s284 + $0x18] sm:$0xff] %v961
        %978 = vst [vmem:[%s284 + $0x20] sm:$0xff] %v962
        %979 = vst [vmem:[%s284 + $0x28] sm:$0xff] %v963
        %980 = vst [vmem:[%s284 + $0x30] sm:$0xff] %v964
        %981 = vst [vmem:[%s284 + $0x38] sm:$0xff] %v965
        %982 = vst [vmem:[%s284 + $0x40] sm:$0xff] %v966
        %983 = vst [vmem:[%s284 + $0x48] sm:$0xff] %v967
        %984 = vst [vmem:[%s284 + $0x50] sm:$0xff] %v968
        %985 = vst [vmem:[%s284 + $0x58] sm:$0xff] %v969
        %986 = vst [vmem:[%s284 + $0x60] sm:$0xff] %v970
        %987 = vst [vmem:[%s284 + $0x68] sm:$0xff] %v971
        %988 = vst [vmem:[%s284 + $0x70] sm:$0xff] %v972
        %989 = vst [vmem:[%s284 + $0x78] sm:$0xff] %v973
        %s990 = sand.u32 %s180, 1
        %s991 = scalar_lea.sflag [#allocation3], %s990
        %s992 = sand.u32 %s180, 1
        %s993 = smul.addr %s992, 128
        %s994 = scalar_lea.vmem [#allocation2], %s993
        // Predicated region
        $region45: #{tpu_custom_call.1} parent=43 // pred_check
          %p995 = pneg %p190
        $region46: #{tpu_custom_call.1} parent=43 // pred_check_branch
          %997 = sbr.rel (%p995) target = $region48
        $region47: #{tpu_custom_call.1} parent=43 // pred_region
          %s998 = smul.u32 2, %s25
          %s1000 = ssub.s32 2048, 2048
          %1001 = vsyncadd %s991, %s1000
          %s1002 = smul.addr %s24, 16
          %s1003 = sadd.s32 %s998, %s1002
          %s1004 = smul.addr %s1003, 128
          %s1005 = scalar_lea.hbm %s6, %s1004
          %s1006 = sshll.u32 %s994, 4
          %s1007 = int_to_ptr.vmem [resolvable:$true] %s1006
          %1012 = dma.vmem_to_hbm [thread:$0]  %s1007, 2048, %s1005, %s991, 256, 256, 16
        $region48: #{tpu_custom_call.1} parent=43 // pred_fallthru
          _
      $region44: #{tpu_custom_call.1} parent=5 // pred_fallthru
        _
      %p1013 = scmp.le.s32.totalorder 2, %s15
      // Predicated region
      $region49: #{tpu_custom_call.1} parent=5 // pred_check
        %p1014 = pneg %p1013
      $region50: #{tpu_custom_call.1} parent=5 // pred_check_branch
        %1016 = sbr.rel (%p1014) target = $region52
      $region51: #{tpu_custom_call.1} parent=5 // pred_region
        %s1017 = ssub.s32 %s15, 2
        // Predicated region
        $region53: #{tpu_custom_call.1} parent=51 // pred_check
          %p1018 = pneg %p196
        $region54: #{tpu_custom_call.1} parent=51 // pred_check_branch
          %1020 = sbr.rel (%p1018) target = $region56
        $region55: #{tpu_custom_call.1} parent=51 // pred_region
          %s1021 = sand.u32 %s181, 1
          %s1022 = scalar_lea.sflag [#allocation3], %s1021
          %s1023 = sand.u32 %s181, 1
          %s1024 = smul.addr %s1023, 128
          %s1025 = scalar_lea.vmem [#allocation2], %s1024
          %1026 = dma.done %s1022, 2048
        $region56: #{tpu_custom_call.1} parent=51 // pred_fallthru
          _
      $region52: #{tpu_custom_call.1} parent=5 // pred_fallthru
        _
    $region6: #{tpu_custom_call.1} parent=1 // loop_footer
      %s19 = sadd.s32 1, %s15
    $region7: #{tpu_custom_call.1} parent=1 // loop_footer_branch
      %14 = sbr.rel target = $region3
    $region8: #{tpu_custom_call.1} parent=1 // loop_exit
      _
    %1027 = vsyncpa [#allocation3], 1
    %s1028 = scalar_lea.sflag [#allocation3], 1
    %1029 = vsyncpa %s1028, 1

</llo_original>
